<compile_context>
chip_gen: v5e
topology: v5e:2x2
jax: 0.10.0
libtpu: 0.0.40
codegen_flags: <defaults>
</compile_context>

<pallas_src>
import numpy as np
import jax
import jax.numpy as jnp
from jax import lax
from jax.experimental import pallas as pl
from jax.experimental.pallas import tpu as pltpu

EMBED_DIM = 32
NUM_HEADS = 4
FF_DIM = 64
SEQ = 8
BATCH = 2
HEAD_DIM = EMBED_DIM // NUM_HEADS
LN_EPS = 1e-5


def _layernorm(x, gamma, beta):
    # x: (N, E); gamma/beta: (1, E). Two-pass variance (numerically robust).
    mean = jnp.mean(x, axis=-1, keepdims=True)
    xc = x - mean
    var = jnp.mean(xc * xc, axis=-1, keepdims=True)
    inv = lax.rsqrt(var + LN_EPS)
    return xc * inv * gamma + beta


def transformer_encoder_kernel(
    x_ref,       # (N, E)        activations, N = S*B rows in (s, b) order
    wqkv_ref,    # (E, 3E)       fused q|k|v projection (pre-transposed, q-scale folded in)
    wo_ref,      # (E, E)        out_proj weight, pre-transposed
    w1_ref,      # (E, FF)       linear_1 weight, pre-transposed
    w2_ref,      # (FF, E)       linear_2 weight, pre-transposed
    vec_ref,     # (8, 128)      packed small vectors (one per row, lane offset 0):
                 #               0: bqkv(96)  1: bo(32)  2: g1(32)  3: b1(32)
                 #               4: bl1(64)   5: bl2(32) 6: g2(32)  7: b2(32)
    o_ref,       # (N, E)
):
    f32 = jnp.float32
    E, H, Dh, FF = EMBED_DIM, NUM_HEADS, HEAD_DIM, FF_DIM

    x = x_ref[...]                       # (N, E)
    N = x.shape[0]
    vec = vec_ref[...]                   # (8, 128)

    bqkv = vec[0:1, 0:3 * E]
    bo   = vec[1:2, 0:E]
    g1   = vec[2:3, 0:E]
    b1   = vec[3:4, 0:E]
    bl1  = vec[4:5, 0:FF]
    bl2  = vec[5:6, 0:E]
    g2   = vec[6:7, 0:E]
    b2   = vec[7:8, 0:E]

    # ---- additive cross-batch mask, generated in-kernel (rows are in (s, b) order) ----
    rows = lax.broadcasted_iota(jnp.int32, (N, N), 0) % BATCH
    cols = lax.broadcasted_iota(jnp.int32, (N, N), 1) % BATCH
    bias = jnp.where(rows == cols, 0.0, -1e30).astype(f32)   # (N, N)

    # ---- fused q/k/v projection: one MXU dot ----
    qkv = jnp.dot(x, wqkv_ref[...], preferred_element_type=f32) + bqkv   # (N, 3E)

    # ---- per-head attention (scores/softmax are inherently per-head) ----
    ctx_heads = []
    for h in range(NUM_HEADS):           # static unroll
        lo = h * Dh
        q = qkv[:, lo:lo + Dh]                       # scale already folded into wq/bq
        k = qkv[:, E + lo:E + lo + Dh]
        v = qkv[:, 2 * E + lo:2 * E + lo + Dh]

        # q @ k^T without transposing k: contract last dims of both operands.
        s = lax.dot_general(q, k, (((1,), (1,)), ((), ())),
                            preferred_element_type=f32) + bias           # (N, N)
        m = jnp.max(s, axis=-1, keepdims=True)
        p = jnp.exp(s - m)
        d = jnp.sum(p, axis=-1, keepdims=True)
        r = pl.reciprocal(d, approx=True)
        r = r * (2.0 - d * r)            # one Newton step -> ~f32-exact reciprocal
        p = p * r

        ctx_heads.append(jnp.dot(p, v, preferred_element_type=f32))      # (N, Dh)

    # ---- fused output projection: single (N,E)@(E,E) dot ----
    ctx = jnp.concatenate(ctx_heads, axis=-1)                            # (N, E)
    attn = jnp.dot(ctx, wo_ref[...], preferred_element_type=f32) + bo

    # ---- residual + layernorm 1 ----
    y = _layernorm(x + attn, g1, b1)

    # ---- feedforward: linear_1 -> relu -> linear_2 ----
    ff = jnp.dot(y, w1_ref[...], preferred_element_type=f32) + bl1
    ff = jnp.maximum(ff, 0.0)
    ff = jnp.dot(ff, w2_ref[...], preferred_element_type=f32) + bl2

    # ---- residual + layernorm 2 ----
    o_ref[...] = _layernorm(y + ff, g2, b2).astype(o_ref.dtype)


def init_params(key):
    """Parameters in PyTorch-native layout/shapes."""
    ks = jax.random.split(key, 6)
    s_in = 1.0 / np.sqrt(EMBED_DIM)
    s_ff = 1.0 / np.sqrt(FF_DIM)
    return dict(
        in_proj_w=jax.random.normal(ks[0], (3 * EMBED_DIM, EMBED_DIM), jnp.float32) * s_in,
        in_proj_b=jax.random.normal(ks[1], (3 * EMBED_DIM,), jnp.float32) * 0.02,
        out_proj_w=jax.random.normal(ks[2], (EMBED_DIM, EMBED_DIM), jnp.float32) * s_in,
        out_proj_b=jnp.zeros((EMBED_DIM,), jnp.float32),
        ln1_w=jnp.ones((EMBED_DIM,), jnp.float32),
        ln1_b=jnp.zeros((EMBED_DIM,), jnp.float32),
        lin1_w=jax.random.normal(ks[3], (FF_DIM, EMBED_DIM), jnp.float32) * s_in,
        lin1_b=jax.random.normal(ks[4], (FF_DIM,), jnp.float32) * 0.02,
        lin2_w=jax.random.normal(ks[5], (EMBED_DIM, FF_DIM), jnp.float32) * s_ff,
        lin2_b=jnp.zeros((EMBED_DIM,), jnp.float32),
        ln2_w=jnp.ones((EMBED_DIM,), jnp.float32),
        ln2_b=jnp.zeros((EMBED_DIM,), jnp.float32),
    )


def prepare_kernel_params(params):
    """One-time weight re-layout: fused QKV slab, fused out_proj, packed small-vector slab."""
    E, FF, Dh = EMBED_DIM, FF_DIM, HEAD_DIM
    scale = np.float32(1.0 / np.sqrt(Dh))

    # Fused qkv = x @ in_proj_w.T + in_proj_b ; columns [q(0:E) | k(E:2E) | v(2E:3E)].
    wqkv = params['in_proj_w'].T.astype(jnp.float32)           # (E, 3E)
    bqkv = params['in_proj_b'].astype(jnp.float32)             # (3E,)
    col_scale = jnp.concatenate([
        jnp.full((E,), scale, jnp.float32),
        jnp.ones((E,), jnp.float32),
        jnp.ones((E,), jnp.float32),
    ])                                                         # fold 1/sqrt(Dh) into q columns
    wqkv = wqkv * col_scale[None, :]
    bqkv = bqkv * col_scale

    # Small vectors packed into one lane-dense (8, 128) slab, one per row at lane offset 0.
    slab = np.zeros((8, 128), np.float32)
    slab[0, 0:3 * E] = np.asarray(bqkv)
    slab[1, 0:E] = np.asarray(params['out_proj_b'])
    slab[2, 0:E] = np.asarray(params['ln1_w'])
    slab[3, 0:E] = np.asarray(params['ln1_b'])
    slab[4, 0:FF] = np.asarray(params['lin1_b'])
    slab[5, 0:E] = np.asarray(params['lin2_b'])
    slab[6, 0:E] = np.asarray(params['ln2_w'])
    slab[7, 0:E] = np.asarray(params['ln2_b'])

    return dict(
        wqkv=wqkv,                                             # (E, 3E)
        wo=params['out_proj_w'].T.astype(jnp.float32),         # (E, E)
        w1=params['lin1_w'].T.astype(jnp.float32),             # (E, FF)
        w2=params['lin2_w'].T.astype(jnp.float32),             # (FF, E)
        vec=jnp.asarray(slab),                                 # (8, 128)
    )


@jax.jit
def transformer_encoder(x_in, kp):
    """x_in: (S, B, E) seq-first, like torch.nn.MultiheadAttention default (batch_first=False)."""
    S, B, E = x_in.shape
    N = S * B
    x2 = x_in.reshape(N, E)                  # free reshape, rows ordered (s, b)

    args = (x2, kp['wqkv'], kp['wo'], kp['w1'], kp['w2'], kp['vec'])
    vmem = pltpu.MemorySpace.VMEM
    out = pl.pallas_call(
        transformer_encoder_kernel,
        out_shape=jax.ShapeDtypeStruct((N, E), jnp.float32),
        in_specs=[pl.BlockSpec(memory_space=vmem) for _ in args],
        out_specs=pl.BlockSpec(memory_space=vmem),
    )(*args)
    return out.reshape(S, B, E)


def reference(x_in, params):
    # Pure-JAX reference mirroring PyTorch MultiheadAttention (eval mode) semantics.
    x = jnp.transpose(x_in, (1, 0, 2)).astype(jnp.float32)  # (B, S, E)
    B, S, E = x.shape
    qkv = x @ params['in_proj_w'].T + params['in_proj_b']
    q, k, v = qkv[..., :E], qkv[..., E:2 * E], qkv[..., 2 * E:]
    q = q.reshape(B, S, NUM_HEADS, HEAD_DIM)
    k = k.reshape(B, S, NUM_HEADS, HEAD_DIM)
    v = v.reshape(B, S, NUM_HEADS, HEAD_DIM)
    s = jnp.einsum('bqhd,bkhd->bhqk', q, k) / np.sqrt(HEAD_DIM)
    p = jax.nn.softmax(s, axis=-1)
    attn = jnp.einsum('bhqk,bkhd->bqhd', p, v).reshape(B, S, E)
    attn = attn @ params['out_proj_w'].T + params['out_proj_b']

    def ln(z, g, b):
        mu = z.mean(-1, keepdims=True)
        var = ((z - mu) ** 2).mean(-1, keepdims=True)
        return (z - mu) / jnp.sqrt(var + LN_EPS) * g + b

    y = ln(x + attn, params['ln1_w'], params['ln1_b'])
    ff = jax.nn.relu(y @ params['lin1_w'].T + params['lin1_b'])
    ff = ff @ params['lin2_w'].T + params['lin2_b']
    out = ln(y + ff, params['ln2_w'], params['ln2_b'])
    return jnp.transpose(out, (1, 0, 2))


if __name__ == "__main__":
    key = jax.random.PRNGKey(0)
    kx, kw = jax.random.split(key)
    x_in = jax.random.normal(kx, (SEQ, BATCH, EMBED_DIM), jnp.float32)
    params = init_params(kw)
    kparams = prepare_kernel_params(params)

    out = transformer_encoder(x_in, kparams)
    out = jax.block_until_ready(out)

    ref = reference(x_in, params)
    np.testing.assert_allclose(np.asarray(out), np.asarray(ref), rtol=1e-4, atol=1e-4)
    assert out.shape == (SEQ, BATCH, EMBED_DIM)
    print("KERNEL_OK")
</pallas_src>

<mosaic_0001>
module attributes {stable_mosaic.version = 11 : i64} {
  func.func @transformer_encoder_kernel(%arg0: memref<16x32xf32, #tpu.memory_space<vmem>>, %arg1: memref<32x96xf32, #tpu.memory_space<vmem>>, %arg2: memref<32x32xf32, #tpu.memory_space<vmem>>, %arg3: memref<32x64xf32, #tpu.memory_space<vmem>>, %arg4: memref<64x32xf32, #tpu.memory_space<vmem>>, %arg5: memref<8x128xf32, #tpu.memory_space<vmem>>, %arg6: memref<16x32xf32, #tpu.memory_space<vmem>>) attributes {dimension_semantics = [], scalar_prefetch = 0 : i64, scratch_operands = 0 : i64, tpu.core_type = #tpu.core_type<tc>} {
    %c0 = arith.constant 0 : index
    %c0_0 = arith.constant 0 : index
    %0 = vector.load %arg0[%c0, %c0_0] : memref<16x32xf32, #tpu.memory_space<vmem>>, vector<16x32xf32>
    %c0_1 = arith.constant 0 : index
    %c0_2 = arith.constant 0 : index
    %1 = vector.load %arg5[%c0_1, %c0_2] : memref<8x128xf32, #tpu.memory_space<vmem>>, vector<8x128xf32>
    %2 = vector.extract_strided_slice %1 {offsets = [0, 0], sizes = [1, 96], strides = [1, 1]} : vector<8x128xf32> to vector<1x96xf32>
    %3 = vector.extract_strided_slice %1 {offsets = [1, 0], sizes = [1, 32], strides = [1, 1]} : vector<8x128xf32> to vector<1x32xf32>
    %4 = vector.extract_strided_slice %1 {offsets = [2, 0], sizes = [1, 32], strides = [1, 1]} : vector<8x128xf32> to vector<1x32xf32>
    %5 = vector.extract_strided_slice %1 {offsets = [3, 0], sizes = [1, 32], strides = [1, 1]} : vector<8x128xf32> to vector<1x32xf32>
    %6 = vector.extract_strided_slice %1 {offsets = [4, 0], sizes = [1, 64], strides = [1, 1]} : vector<8x128xf32> to vector<1x64xf32>
    %7 = vector.extract_strided_slice %1 {offsets = [5, 0], sizes = [1, 32], strides = [1, 1]} : vector<8x128xf32> to vector<1x32xf32>
    %8 = vector.extract_strided_slice %1 {offsets = [6, 0], sizes = [1, 32], strides = [1, 1]} : vector<8x128xf32> to vector<1x32xf32>
    %9 = vector.extract_strided_slice %1 {offsets = [7, 0], sizes = [1, 32], strides = [1, 1]} : vector<8x128xf32> to vector<1x32xf32>
    %10 = tpu.iota {dimensions = array<i32: 0>} : vector<16x16xi32>
    %c2_i32 = arith.constant 2 : i32
    %c0_i32 = arith.constant 0 : i32
    %11 = arith.cmpi eq, %c2_i32, %c0_i32 : i32
    %c1_i32 = arith.constant 1 : i32
    %12 = arith.select %11, %c1_i32, %c2_i32 : i32
    %13 = vector.broadcast %12 : i32 to vector<16x16xi32>
    %14 = arith.remsi %10, %13 : vector<16x16xi32>
    %c0_i32_3 = arith.constant 0 : i32
    %15 = vector.broadcast %c0_i32_3 : i32 to vector<16x16xi32>
    %16 = arith.cmpi ne, %14, %15 : vector<16x16xi32>
    %c0_i32_4 = arith.constant 0 : i32
    %17 = vector.broadcast %c0_i32_4 : i32 to vector<16x16xi32>
    %18 = arith.cmpi slt, %14, %17 : vector<16x16xi32>
    %c0_i32_5 = arith.constant 0 : i32
    %19 = arith.cmpi slt, %12, %c0_i32_5 : i32
    %20 = vector.broadcast %19 : i1 to vector<16x16xi1>
    %21 = vector.broadcast %20 : vector<16x16xi1> to vector<16x16xi1>
    %22 = arith.xori %18, %21 : vector<16x16xi1>
    %23 = arith.andi %22, %16 : vector<16x16xi1>
    %24 = vector.broadcast %12 : i32 to vector<16x16xi32>
    %25 = arith.addi %14, %24 : vector<16x16xi32>
    %26 = arith.select %23, %25, %14 : vector<16x16xi1>, vector<16x16xi32>
    %27 = tpu.iota {dimensions = array<i32: 1>} : vector<16x16xi32>
    %c2_i32_6 = arith.constant 2 : i32
    %c0_i32_7 = arith.constant 0 : i32
    %28 = arith.cmpi eq, %c2_i32_6, %c0_i32_7 : i32
    %c1_i32_8 = arith.constant 1 : i32
    %29 = arith.select %28, %c1_i32_8, %c2_i32_6 : i32
    %30 = vector.broadcast %29 : i32 to vector<16x16xi32>
    %31 = arith.remsi %27, %30 : vector<16x16xi32>
    %c0_i32_9 = arith.constant 0 : i32
    %32 = vector.broadcast %c0_i32_9 : i32 to vector<16x16xi32>
    %33 = arith.cmpi ne, %31, %32 : vector<16x16xi32>
    %c0_i32_10 = arith.constant 0 : i32
    %34 = vector.broadcast %c0_i32_10 : i32 to vector<16x16xi32>
    %35 = arith.cmpi slt, %31, %34 : vector<16x16xi32>
    %c0_i32_11 = arith.constant 0 : i32
    %36 = arith.cmpi slt, %29, %c0_i32_11 : i32
    %37 = vector.broadcast %36 : i1 to vector<16x16xi1>
    %38 = vector.broadcast %37 : vector<16x16xi1> to vector<16x16xi1>
    %39 = arith.xori %35, %38 : vector<16x16xi1>
    %40 = arith.andi %39, %33 : vector<16x16xi1>
    %41 = vector.broadcast %29 : i32 to vector<16x16xi32>
    %42 = arith.addi %31, %41 : vector<16x16xi32>
    %43 = arith.select %40, %42, %31 : vector<16x16xi1>, vector<16x16xi32>
    %44 = arith.cmpi eq, %26, %43 : vector<16x16xi32>
    %cst = arith.constant 0.000000e+00 : f32
    %cst_12 = arith.constant -1.000000e+30 : f32
    %45 = vector.broadcast %cst : f32 to vector<16x16xf32>
    %46 = vector.broadcast %cst_12 : f32 to vector<16x16xf32>
    %47 = arith.select %44, %45, %46 : vector<16x16xi1>, vector<16x16xf32>
    %c0_13 = arith.constant 0 : index
    %c0_14 = arith.constant 0 : index
    %48 = vector.load %arg1[%c0_13, %c0_14] : memref<32x96xf32, #tpu.memory_space<vmem>>, vector<32x96xf32>
    %cst_15 = arith.constant dense<0.000000e+00> : vector<16x96xf32>
    %49 = tpu.matmul %0, %48, %cst_15 {dimension_numbers = #tpu.dot_dimension_numbers<[1], [0], [0], [1], [0, 0, 1, 1], [], []>} : vector<16x32xf32>, vector<32x96xf32>, vector<16x96xf32> -> vector<16x96xf32>
    %50 = vector.broadcast %2 : vector<1x96xf32> to vector<16x96xf32>
    %51 = arith.addf %49, %50 : vector<16x96xf32>
    %52 = vector.extract_strided_slice %51 {offsets = [0, 0], sizes = [16, 8], strides = [1, 1]} : vector<16x96xf32> to vector<16x8xf32>
    %53 = vector.extract_strided_slice %51 {offsets = [0, 32], sizes = [16, 8], strides = [1, 1]} : vector<16x96xf32> to vector<16x8xf32>
    %54 = vector.extract_strided_slice %51 {offsets = [0, 64], sizes = [16, 8], strides = [1, 1]} : vector<16x96xf32> to vector<16x8xf32>
    %cst_16 = arith.constant dense<0.000000e+00> : vector<16x16xf32>
    %55 = tpu.matmul %52, %53, %cst_16 {dimension_numbers = #tpu.dot_dimension_numbers<[1], [1], [0], [0], [0, 0, 1, 0], [], []>} : vector<16x8xf32>, vector<16x8xf32>, vector<16x16xf32> -> vector<16x16xf32>
    %56 = arith.addf %55, %47 : vector<16x16xf32>
    %cst_17 = arith.constant dense<0xFF800000> : vector<16xf32>
    %57 = vector.multi_reduction <maximumf>, %56, %cst_17 [1] : vector<16x16xf32> to vector<16xf32>
    %58 = vector.shape_cast %57 : vector<16xf32> to vector<16x1xf32>
    %59 = vector.broadcast %58 : vector<16x1xf32> to vector<16x16xf32>
    %60 = arith.subf %56, %59 : vector<16x16xf32>
    %61 = math.exp %60 : vector<16x16xf32>
    %cst_18 = arith.constant dense<0.000000e+00> : vector<16xf32>
    %62 = vector.multi_reduction <add>, %61, %cst_18 [1] : vector<16x16xf32> to vector<16xf32>
    %63 = vector.shape_cast %62 : vector<16xf32> to vector<16x1xf32>
    %64 = tpu.reciprocal %63 {approx = true} : vector<16x1xf32> -> vector<16x1xf32>
    %65 = arith.mulf %63, %64 : vector<16x1xf32>
    %cst_19 = arith.constant 2.000000e+00 : f32
    %66 = vector.broadcast %cst_19 : f32 to vector<16x1xf32>
    %67 = arith.subf %66, %65 : vector<16x1xf32>
    %68 = arith.mulf %64, %67 : vector<16x1xf32>
    %69 = vector.broadcast %68 : vector<16x1xf32> to vector<16x16xf32>
    %70 = arith.mulf %61, %69 : vector<16x16xf32>
    %cst_20 = arith.constant dense<0.000000e+00> : vector<16x8xf32>
    %71 = tpu.matmul %70, %54, %cst_20 {dimension_numbers = #tpu.dot_dimension_numbers<[1], [0], [0], [1], [0, 0, 1, 1], [], []>} : vector<16x16xf32>, vector<16x8xf32>, vector<16x8xf32> -> vector<16x8xf32>
    %72 = vector.extract_strided_slice %51 {offsets = [0, 8], sizes = [16, 8], strides = [1, 1]} : vector<16x96xf32> to vector<16x8xf32>
    %73 = vector.extract_strided_slice %51 {offsets = [0, 40], sizes = [16, 8], strides = [1, 1]} : vector<16x96xf32> to vector<16x8xf32>
    %74 = vector.extract_strided_slice %51 {offsets = [0, 72], sizes = [16, 8], strides = [1, 1]} : vector<16x96xf32> to vector<16x8xf32>
    %cst_21 = arith.constant dense<0.000000e+00> : vector<16x16xf32>
    %75 = tpu.matmul %72, %73, %cst_21 {dimension_numbers = #tpu.dot_dimension_numbers<[1], [1], [0], [0], [0, 0, 1, 0], [], []>} : vector<16x8xf32>, vector<16x8xf32>, vector<16x16xf32> -> vector<16x16xf32>
    %76 = arith.addf %75, %47 : vector<16x16xf32>
    %cst_22 = arith.constant dense<0xFF800000> : vector<16xf32>
    %77 = vector.multi_reduction <maximumf>, %76, %cst_22 [1] : vector<16x16xf32> to vector<16xf32>
    %78 = vector.shape_cast %77 : vector<16xf32> to vector<16x1xf32>
    %79 = vector.broadcast %78 : vector<16x1xf32> to vector<16x16xf32>
    %80 = arith.subf %76, %79 : vector<16x16xf32>
    %81 = math.exp %80 : vector<16x16xf32>
    %cst_23 = arith.constant dense<0.000000e+00> : vector<16xf32>
    %82 = vector.multi_reduction <add>, %81, %cst_23 [1] : vector<16x16xf32> to vector<16xf32>
    %83 = vector.shape_cast %82 : vector<16xf32> to vector<16x1xf32>
    %84 = tpu.reciprocal %83 {approx = true} : vector<16x1xf32> -> vector<16x1xf32>
    %85 = arith.mulf %83, %84 : vector<16x1xf32>
    %cst_24 = arith.constant 2.000000e+00 : f32
    %86 = vector.broadcast %cst_24 : f32 to vector<16x1xf32>
    %87 = arith.subf %86, %85 : vector<16x1xf32>
    %88 = arith.mulf %84, %87 : vector<16x1xf32>
    %89 = vector.broadcast %88 : vector<16x1xf32> to vector<16x16xf32>
    %90 = arith.mulf %81, %89 : vector<16x16xf32>
    %cst_25 = arith.constant dense<0.000000e+00> : vector<16x8xf32>
    %91 = tpu.matmul %90, %74, %cst_25 {dimension_numbers = #tpu.dot_dimension_numbers<[1], [0], [0], [1], [0, 0, 1, 1], [], []>} : vector<16x16xf32>, vector<16x8xf32>, vector<16x8xf32> -> vector<16x8xf32>
    %92 = vector.extract_strided_slice %51 {offsets = [0, 16], sizes = [16, 8], strides = [1, 1]} : vector<16x96xf32> to vector<16x8xf32>
    %93 = vector.extract_strided_slice %51 {offsets = [0, 48], sizes = [16, 8], strides = [1, 1]} : vector<16x96xf32> to vector<16x8xf32>
    %94 = vector.extract_strided_slice %51 {offsets = [0, 80], sizes = [16, 8], strides = [1, 1]} : vector<16x96xf32> to vector<16x8xf32>
    %cst_26 = arith.constant dense<0.000000e+00> : vector<16x16xf32>
    %95 = tpu.matmul %92, %93, %cst_26 {dimension_numbers = #tpu.dot_dimension_numbers<[1], [1], [0], [0], [0, 0, 1, 0], [], []>} : vector<16x8xf32>, vector<16x8xf32>, vector<16x16xf32> -> vector<16x16xf32>
    %96 = arith.addf %95, %47 : vector<16x16xf32>
    %cst_27 = arith.constant dense<0xFF800000> : vector<16xf32>
    %97 = vector.multi_reduction <maximumf>, %96, %cst_27 [1] : vector<16x16xf32> to vector<16xf32>
    %98 = vector.shape_cast %97 : vector<16xf32> to vector<16x1xf32>
    %99 = vector.broadcast %98 : vector<16x1xf32> to vector<16x16xf32>
    %100 = arith.subf %96, %99 : vector<16x16xf32>
    %101 = math.exp %100 : vector<16x16xf32>
    %cst_28 = arith.constant dense<0.000000e+00> : vector<16xf32>
    %102 = vector.multi_reduction <add>, %101, %cst_28 [1] : vector<16x16xf32> to vector<16xf32>
    %103 = vector.shape_cast %102 : vector<16xf32> to vector<16x1xf32>
    %104 = tpu.reciprocal %103 {approx = true} : vector<16x1xf32> -> vector<16x1xf32>
    %105 = arith.mulf %103, %104 : vector<16x1xf32>
    %cst_29 = arith.constant 2.000000e+00 : f32
    %106 = vector.broadcast %cst_29 : f32 to vector<16x1xf32>
    %107 = arith.subf %106, %105 : vector<16x1xf32>
    %108 = arith.mulf %104, %107 : vector<16x1xf32>
    %109 = vector.broadcast %108 : vector<16x1xf32> to vector<16x16xf32>
    %110 = arith.mulf %101, %109 : vector<16x16xf32>
    %cst_30 = arith.constant dense<0.000000e+00> : vector<16x8xf32>
    %111 = tpu.matmul %110, %94, %cst_30 {dimension_numbers = #tpu.dot_dimension_numbers<[1], [0], [0], [1], [0, 0, 1, 1], [], []>} : vector<16x16xf32>, vector<16x8xf32>, vector<16x8xf32> -> vector<16x8xf32>
    %112 = vector.extract_strided_slice %51 {offsets = [0, 24], sizes = [16, 8], strides = [1, 1]} : vector<16x96xf32> to vector<16x8xf32>
    %113 = vector.extract_strided_slice %51 {offsets = [0, 56], sizes = [16, 8], strides = [1, 1]} : vector<16x96xf32> to vector<16x8xf32>
    %114 = vector.extract_strided_slice %51 {offsets = [0, 88], sizes = [16, 8], strides = [1, 1]} : vector<16x96xf32> to vector<16x8xf32>
    %cst_31 = arith.constant dense<0.000000e+00> : vector<16x16xf32>
    %115 = tpu.matmul %112, %113, %cst_31 {dimension_numbers = #tpu.dot_dimension_numbers<[1], [1], [0], [0], [0, 0, 1, 0], [], []>} : vector<16x8xf32>, vector<16x8xf32>, vector<16x16xf32> -> vector<16x16xf32>
    %116 = arith.addf %115, %47 : vector<16x16xf32>
    %cst_32 = arith.constant dense<0xFF800000> : vector<16xf32>
    %117 = vector.multi_reduction <maximumf>, %116, %cst_32 [1] : vector<16x16xf32> to vector<16xf32>
    %118 = vector.shape_cast %117 : vector<16xf32> to vector<16x1xf32>
    %119 = vector.broadcast %118 : vector<16x1xf32> to vector<16x16xf32>
    %120 = arith.subf %116, %119 : vector<16x16xf32>
    %121 = math.exp %120 : vector<16x16xf32>
    %cst_33 = arith.constant dense<0.000000e+00> : vector<16xf32>
    %122 = vector.multi_reduction <add>, %121, %cst_33 [1] : vector<16x16xf32> to vector<16xf32>
    %123 = vector.shape_cast %122 : vector<16xf32> to vector<16x1xf32>
    %124 = tpu.reciprocal %123 {approx = true} : vector<16x1xf32> -> vector<16x1xf32>
    %125 = arith.mulf %123, %124 : vector<16x1xf32>
    %cst_34 = arith.constant 2.000000e+00 : f32
    %126 = vector.broadcast %cst_34 : f32 to vector<16x1xf32>
    %127 = arith.subf %126, %125 : vector<16x1xf32>
    %128 = arith.mulf %124, %127 : vector<16x1xf32>
    %129 = vector.broadcast %128 : vector<16x1xf32> to vector<16x16xf32>
    %130 = arith.mulf %121, %129 : vector<16x16xf32>
    %cst_35 = arith.constant dense<0.000000e+00> : vector<16x8xf32>
    %131 = tpu.matmul %130, %114, %cst_35 {dimension_numbers = #tpu.dot_dimension_numbers<[1], [0], [0], [1], [0, 0, 1, 1], [], []>} : vector<16x16xf32>, vector<16x8xf32>, vector<16x8xf32> -> vector<16x8xf32>
    %132 = tpu.concatenate %71, %91, %111, %131 in 1 : vector<16x8xf32>, vector<16x8xf32>, vector<16x8xf32>, vector<16x8xf32> -> vector<16x32xf32>
    %c0_36 = arith.constant 0 : index
    %c0_37 = arith.constant 0 : index
    %133 = vector.load %arg2[%c0_36, %c0_37] : memref<32x32xf32, #tpu.memory_space<vmem>>, vector<32x32xf32>
    %cst_38 = arith.constant dense<0.000000e+00> : vector<16x32xf32>
    %134 = tpu.matmul %132, %133, %cst_38 {dimension_numbers = #tpu.dot_dimension_numbers<[1], [0], [0], [1], [0, 0, 1, 1], [], []>} : vector<16x32xf32>, vector<32x32xf32>, vector<16x32xf32> -> vector<16x32xf32>
    %135 = vector.broadcast %3 : vector<1x32xf32> to vector<16x32xf32>
    %136 = arith.addf %134, %135 : vector<16x32xf32>
    %137 = arith.addf %0, %136 : vector<16x32xf32>
    %cst_39 = arith.constant dense<0.000000e+00> : vector<16xf32>
    %138 = vector.multi_reduction <add>, %137, %cst_39 [1] : vector<16x32xf32> to vector<16xf32>
    %139 = vector.shape_cast %138 : vector<16xf32> to vector<16x1xf32>
    %cst_40 = arith.constant 3.200000e+01 : f32
    %140 = vector.broadcast %cst_40 : f32 to vector<16x1xf32>
    %141 = arith.divf %139, %140 : vector<16x1xf32>
    %142 = vector.broadcast %141 : vector<16x1xf32> to vector<16x32xf32>
    %143 = arith.subf %137, %142 : vector<16x32xf32>
    %144 = arith.mulf %143, %143 : vector<16x32xf32>
    %cst_41 = arith.constant dense<0.000000e+00> : vector<16xf32>
    %145 = vector.multi_reduction <add>, %144, %cst_41 [1] : vector<16x32xf32> to vector<16xf32>
    %146 = vector.shape_cast %145 : vector<16xf32> to vector<16x1xf32>
    %cst_42 = arith.constant 3.200000e+01 : f32
    %147 = vector.broadcast %cst_42 : f32 to vector<16x1xf32>
    %148 = arith.divf %146, %147 : vector<16x1xf32>
    %cst_43 = arith.constant 9.99999974E-6 : f32
    %149 = vector.broadcast %cst_43 : f32 to vector<16x1xf32>
    %150 = arith.addf %148, %149 : vector<16x1xf32>
    %151 = math.rsqrt %150 : vector<16x1xf32>
    %152 = vector.broadcast %151 : vector<16x1xf32> to vector<16x32xf32>
    %153 = arith.mulf %143, %152 : vector<16x32xf32>
    %154 = vector.broadcast %4 : vector<1x32xf32> to vector<16x32xf32>
    %155 = arith.mulf %153, %154 : vector<16x32xf32>
    %156 = vector.broadcast %5 : vector<1x32xf32> to vector<16x32xf32>
    %157 = arith.addf %155, %156 : vector<16x32xf32>
    %c0_44 = arith.constant 0 : index
    %c0_45 = arith.constant 0 : index
    %158 = vector.load %arg3[%c0_44, %c0_45] : memref<32x64xf32, #tpu.memory_space<vmem>>, vector<32x64xf32>
    %cst_46 = arith.constant dense<0.000000e+00> : vector<16x64xf32>
    %159 = tpu.matmul %157, %158, %cst_46 {dimension_numbers = #tpu.dot_dimension_numbers<[1], [0], [0], [1], [0, 0, 1, 1], [], []>} : vector<16x32xf32>, vector<32x64xf32>, vector<16x64xf32> -> vector<16x64xf32>
    %160 = vector.broadcast %6 : vector<1x64xf32> to vector<16x64xf32>
    %161 = arith.addf %159, %160 : vector<16x64xf32>
    %cst_47 = arith.constant 0.000000e+00 : f32
    %162 = vector.broadcast %cst_47 : f32 to vector<16x64xf32>
    %163 = arith.maximumf %161, %162 : vector<16x64xf32>
    %c0_48 = arith.constant 0 : index
    %c0_49 = arith.constant 0 : index
    %164 = vector.load %arg4[%c0_48, %c0_49] : memref<64x32xf32, #tpu.memory_space<vmem>>, vector<64x32xf32>
    %cst_50 = arith.constant dense<0.000000e+00> : vector<16x32xf32>
    %165 = tpu.matmul %163, %164, %cst_50 {dimension_numbers = #tpu.dot_dimension_numbers<[1], [0], [0], [1], [0, 0, 1, 1], [], []>} : vector<16x64xf32>, vector<64x32xf32>, vector<16x32xf32> -> vector<16x32xf32>
    %166 = vector.broadcast %7 : vector<1x32xf32> to vector<16x32xf32>
    %167 = arith.addf %165, %166 : vector<16x32xf32>
    %168 = arith.addf %157, %167 : vector<16x32xf32>
    %cst_51 = arith.constant dense<0.000000e+00> : vector<16xf32>
    %169 = vector.multi_reduction <add>, %168, %cst_51 [1] : vector<16x32xf32> to vector<16xf32>
    %170 = vector.shape_cast %169 : vector<16xf32> to vector<16x1xf32>
    %cst_52 = arith.constant 3.200000e+01 : f32
    %171 = vector.broadcast %cst_52 : f32 to vector<16x1xf32>
    %172 = arith.divf %170, %171 : vector<16x1xf32>
    %173 = vector.broadcast %172 : vector<16x1xf32> to vector<16x32xf32>
    %174 = arith.subf %168, %173 : vector<16x32xf32>
    %175 = arith.mulf %174, %174 : vector<16x32xf32>
    %cst_53 = arith.constant dense<0.000000e+00> : vector<16xf32>
    %176 = vector.multi_reduction <add>, %175, %cst_53 [1] : vector<16x32xf32> to vector<16xf32>
    %177 = vector.shape_cast %176 : vector<16xf32> to vector<16x1xf32>
    %cst_54 = arith.constant 3.200000e+01 : f32
    %178 = vector.broadcast %cst_54 : f32 to vector<16x1xf32>
    %179 = arith.divf %177, %178 : vector<16x1xf32>
    %cst_55 = arith.constant 9.99999974E-6 : f32
    %180 = vector.broadcast %cst_55 : f32 to vector<16x1xf32>
    %181 = arith.addf %179, %180 : vector<16x1xf32>
    %182 = math.rsqrt %181 : vector<16x1xf32>
    %183 = vector.broadcast %182 : vector<16x1xf32> to vector<16x32xf32>
    %184 = arith.mulf %174, %183 : vector<16x32xf32>
    %185 = vector.broadcast %8 : vector<1x32xf32> to vector<16x32xf32>
    %186 = arith.mulf %184, %185 : vector<16x32xf32>
    %187 = vector.broadcast %9 : vector<1x32xf32> to vector<16x32xf32>
    %188 = arith.addf %186, %187 : vector<16x32xf32>
    %c0_56 = arith.constant 0 : index
    %c0_57 = arith.constant 0 : index
    %189 = vector.load %arg6[%c0_56, %c0_57] : memref<16x32xf32, #tpu.memory_space<vmem>>, vector<16x32xf32>
    tpu.vector_store %arg6[%c0_56, %c0_57], %188 {strides = array<i32>} : memref<16x32xf32, #tpu.memory_space<vmem>>, vector<16x32xf32>,
    return
  }
}

</mosaic_0001>

<llo_original>
// kernel: transformer_encoder.1
$region0: #{transformer_encoder.1}
  #allocation0 [shape = 'u32[]', space=smem, size = 0x4, offset = 0x4, fixed_abs, tag = 'smem constant byte address 0x4 - core index']
  #allocation1 [shape = 'u32[72,128]{1,0:T(1,128)}', space=vmem, size = 0x9000, scoped, tag = 'internal scratch']
  %s0 = inlined_call_operand.hbm [shape: f32[16,32], index: 0, kind: input, shape index: {}]
  %s1 = inlined_call_operand.vmem [shape: f32[32,96], index: 1, kind: input, shape index: {}]
  %s2 = inlined_call_operand.vmem [shape: f32[32,32], index: 2, kind: input, shape index: {}]
  %s3 = inlined_call_operand.vmem [shape: f32[32,64], index: 3, kind: input, shape index: {}]
  %s4 = inlined_call_operand.vmem [shape: f32[64,32], index: 4, kind: input, shape index: {}]
  %s5 = inlined_call_operand.hbm [shape: f32[8,128], index: 5, kind: input, shape index: {}]
  %s6 = inlined_call_operand.hbm [shape: f32[16,32], index: 6, kind: output, shape index: {}]
  %s7 = sld [smem:[#allocation0]]
  $region42: #{transformer_encoder.1} parent=0
    _
  %s9 = ssub.s32 1, %s7
  %s10 = scalar_select 0, %s9, %s7
  $region1: #{transformer_encoder.1} parent=0
    #allocation2 [shape = 'u8[8192]{0}', space=vmem, size = 0x2000, scoped, tag = 'input window, operand 0, single buffered']
    #allocation3 [shape = 's32[1]{0}', space=sflag, size = 0x4, scoped, tag = 'scoped memory for transformer_encoder.1']
    #allocation4 [shape = 's32[1]{0}', space=sflag, size = 0x4, scoped, tag = 'scoped memory for transformer_encoder.1']
    #allocation5 [shape = 'u8[4096]{0}', space=vmem, size = 0x1000, scoped, tag = 'input window, operand 5, single buffered']
    #allocation6 [shape = 's32[1]{0}', space=sflag, size = 0x4, scoped, tag = 'scoped memory for transformer_encoder.1']
    #allocation7 [shape = 'u8[8192]{0}', space=vmem, size = 0x2000, scoped, tag = 'output window, operand 0, single buffered']
    %11 = vsyncpa [#allocation3], 0
    %12 = vsyncpa [#allocation6], 0
    %13 = vsyncpa [#allocation4], 0
    // Predicated region
    $region2: #{transformer_encoder.1} parent=1 // pred_check
      _
    $region3: #{transformer_encoder.1} parent=1 // pred_check_branch
      %15 = sbr.rel (0) target = $region5
    $region4: #{transformer_encoder.1} parent=1 // pred_region
      %17 = vsyncadd [#allocation3], 0
      %s18 = sshll.u32 %s0, 4
      %s19 = int_to_ptr.hbm [resolvable:$true] %s18
      %s20 = sshll.u32 [#allocation2], 4
      %s21 = int_to_ptr.vmem [resolvable:$true] %s20
      %26 = dma.hbm_to_vmem [thread:$0]  %s19, 256, %s21, [#allocation3], 128, 128, 8
    $region5: #{transformer_encoder.1} parent=1 // pred_fallthru
      _
    // Predicated region
    $region6: #{transformer_encoder.1} parent=1 // pred_check
      _
    $region7: #{transformer_encoder.1} parent=1 // pred_check_branch
      %28 = sbr.rel (0) target = $region9
    $region8: #{transformer_encoder.1} parent=1 // pred_region
      _
    $region9: #{transformer_encoder.1} parent=1 // pred_fallthru
      _
    // Predicated region
    $region10: #{transformer_encoder.1} parent=1 // pred_check
      _
    $region11: #{transformer_encoder.1} parent=1 // pred_check_branch
      %30 = sbr.rel (0) target = $region13
    $region12: #{transformer_encoder.1} parent=1 // pred_region
      _
    $region13: #{transformer_encoder.1} parent=1 // pred_fallthru
      _
    // Predicated region
    $region14: #{transformer_encoder.1} parent=1 // pred_check
      _
    $region15: #{transformer_encoder.1} parent=1 // pred_check_branch
      %32 = sbr.rel (0) target = $region17
    $region16: #{transformer_encoder.1} parent=1 // pred_region
      _
    $region17: #{transformer_encoder.1} parent=1 // pred_fallthru
      _
    // Predicated region
    $region18: #{transformer_encoder.1} parent=1 // pred_check
      _
    $region19: #{transformer_encoder.1} parent=1 // pred_check_branch
      %34 = sbr.rel (0) target = $region21
    $region20: #{transformer_encoder.1} parent=1 // pred_region
      _
    $region21: #{transformer_encoder.1} parent=1 // pred_fallthru
      _
    // Predicated region
    $region22: #{transformer_encoder.1} parent=1 // pred_check
      _
    $region23: #{transformer_encoder.1} parent=1 // pred_check_branch
      %36 = sbr.rel (0) target = $region25
    $region24: #{transformer_encoder.1} parent=1 // pred_region
      %38 = vsyncadd [#allocation6], 0
      %s40 = sshll.u32 %s5, 4
      %s41 = int_to_ptr.hbm [resolvable:$true] %s40
      %s42 = sshll.u32 [#allocation5], 4
      %s43 = int_to_ptr.vmem [resolvable:$true] %s42
      %45 = dma.hbm_to_vmem [thread:$0]  %s41, 128, %s43, [#allocation6]
    $region25: #{transformer_encoder.1} parent=1 // pred_fallthru
      _
    // Predicated region
    $region26: #{transformer_encoder.1} parent=1 // pred_check
      _
    $region27: #{transformer_encoder.1} parent=1 // pred_check_branch
      %47 = sbr.rel (0) target = $region29
    $region28: #{transformer_encoder.1} parent=1 // pred_region
      %49 = dma.done [#allocation3], 256
    $region29: #{transformer_encoder.1} parent=1 // pred_fallthru
      _
    // Predicated region
    $region30: #{transformer_encoder.1} parent=1 // pred_check
      _
    $region31: #{transformer_encoder.1} parent=1 // pred_check_branch
      %51 = sbr.rel (0) target = $region33
    $region32: #{transformer_encoder.1} parent=1 // pred_region
      %53 = dma.done [#allocation6], 128
    $region33: #{transformer_encoder.1} parent=1 // pred_fallthru
      _
    %v54 = vld [vmem:[#allocation2] sm:$0xff]
    %v55 = vld [vmem:[#allocation2 + $0x8] sm:$0xff]
    %v56 = vld [vmem:[#allocation5] sm:$0xff]
    %v57 = vlaneseq
    %v58 = vshrl.u32 %v57, 7
    %v59 = vadd.s32 %v58, 8
    %vm60 = vcmp.lt.s32.totalorder %v58, 0
    %v61 = vsub.s32 0, %v58
    %v62 = vsel %vm60, %v61, %v58
    %v63 = vshrl.u32 %v62, 1
    %v64 = vand.u32 %v62, 1
    %v65 = vsub.s32 0, %v64
    %v66 = vsel %vm60, %v65, %v64
    %vm67 = vcmp.lt.s32.totalorder %v59, 0
    %v68 = vsub.s32 0, %v59
    %v69 = vsel %vm67, %v68, %v59
    %v70 = vshrl.u32 %v69, 1
    %v71 = vand.u32 %v69, 1
    %v72 = vsub.s32 0, %v71
    %v73 = vsel %vm67, %v72, %v71
    %vm74 = vcmp.ne.s32.totalorder %v66, 0
    %vm75 = vcmp.ne.s32.totalorder %v73, 0
    %vm76 = vcmp.lt.s32.totalorder %v66, 0
    %vm77 = vcmp.lt.s32.totalorder %v73, 0
    %vm78 = vmand %vm76, %vm74
    %vm79 = vmand %vm77, %vm75
    %v80 = vadd.s32 %v66, 2
    %v81 = vadd.s32 %v73, 2
    %v82 = vsel %vm78, %v80, %v66
    %v83 = vsel %vm79, %v81, %v73
    %v84 = vlaneseq
    %v85 = vand.u32 %v84, 127
    %vm86 = vcmp.lt.s32.totalorder %v85, 0
    %v87 = vsub.s32 0, %v85
    %v88 = vsel %vm86, %v87, %v85
    %v89 = vshrl.u32 %v88, 1
    %v90 = vand.u32 %v88, 1
    %v91 = vsub.s32 0, %v90
    %v92 = vsel %vm86, %v91, %v90
    %vm93 = vcmp.ne.s32.totalorder %v92, 0
    %vm94 = vcmp.lt.s32.totalorder %v92, 0
    %vm95 = vmand %vm94, %vm93
    %v96 = vadd.s32 %v92, 2
    %v97 = vsel %vm95, %v96, %v92
    %vm98 = vcmp.eq.s32.totalorder %v82, %v97
    %vm99 = vcmp.eq.s32.totalorder %v83, %v97
    %v100 = vsel %vm98, 0.0, -1e+30
    %v101 = vsel %vm99, 0.0, -1e+30
    %v102 = vld [vmem:[%s1] sm:$0xff]
    %v103 = vld [vmem:[%s1 + $0x8] sm:$0xff]
    %v104 = vld [vmem:[%s1 + $0x10] sm:$0xff]
    %v105 = vld [vmem:[%s1 + $0x18] sm:$0xff]
    %v106 = vperm.slane %v56, 0
    %vm107 = vcmask 261120
    %v109 = vsel %vm107, %v54, 0
    %v112 = vsel %vm107, %v55, 0
    %114 = vmatpush.msra.mxu0 0.0
    %115 = vmatpush.msra.mxu0 0.0
    %116 = vmatpush.msra.mxu0 0.0
    %117 = vmatpush.msra.mxu0 0.0
    %118 = vmatpush.msra.mxu0 0.0
    %119 = vmatpush.msra.mxu0 0.0
    %120 = vmatpush.msra.mxu0 0.0
    %121 = vmatpush.msra.mxu0 0.0
    %122 = vmatpush.msra.mxu0 0.0
    %123 = vmatpush.msra.mxu0 0.0
    %124 = vmatpush.msra.mxu0 0.0
    %125 = vmatpush.msra.mxu0 0.0
    %126 = vmatpush.msra.mxu0 %v105
    %127 = vmatpush.msra.mxu0 %v104
    %128 = vmatpush.msra.mxu0 %v103
    %129 = vmatpush.msra.mxu0 %v102
    %130 = vmatmul.f32.gmra.mxu0 %v109
    %v131 = vpop.f32.mrf.mxu0
    %v132 = vadd.f32 %v106, %v131
    %133 = vmatmul.f32.gmra.mxu0 %v112
    %v134 = vpop.f32.mrf.mxu0
    %v135 = vadd.f32 %v106, %v134
    %136 = vdwg.mxu0
    %139 = vrot.lane.b32.xlu0 %v132, 96
    %v140 = vpop.permute.xlu0 %139
    %141 = vrot.lane.b32.xlu0 %v135, 96
    %v142 = vpop.permute.xlu0 %141
    %vm143 = vcmask 64512
    %v144 = vsel %vm143, %v132, 0
    %v146 = vsel %vm143, %v135, 0
    %v148 = vsel %vm143, %v140, 0
    %v150 = vsel %vm143, %v142, 0
    %152 = vmatpush.xpose.msra.mxu0 0.0
    %153 = vmatpush.xpose.msra.mxu0 0.0
    %154 = vmatpush.xpose.msra.mxu0 0.0
    %155 = vmatpush.xpose.msra.mxu0 0.0
    %156 = vmatpush.xpose.msra.mxu0 0.0
    %157 = vmatpush.xpose.msra.mxu0 0.0
    %158 = vmatpush.xpose.msra.mxu0 0.0
    %159 = vmatpush.xpose.msra.mxu0 0.0
    %160 = vmatpush.xpose.msra.mxu0 0.0
    %161 = vmatpush.xpose.msra.mxu0 0.0
    %162 = vmatpush.xpose.msra.mxu0 0.0
    %163 = vmatpush.xpose.msra.mxu0 0.0
    %164 = vmatpush.xpose.msra.mxu0 0.0
    %165 = vmatpush.xpose.msra.mxu0 0.0
    %166 = vmatpush.xpose.msra.mxu0 %v150
    %167 = vmatpush.xpose.msra.mxu0 %v148
    %168 = vmatmul.f32.gmra.mxu0 %v144
    %v169 = vpop.f32.mrf.mxu0
    %v170 = vadd.f32 %v100, %v169
    %171 = vmatmul.f32.gmra.mxu0 %v146
    %v172 = vpop.f32.mrf.mxu0
    %v173 = vadd.f32 %v101, %v172
    %174 = vdwg.mxu0
    %vm175 = vcmask 130048
    %v176 = vsel %vm175, %v170, -inf
    %177 = vmax.xlane.f32.xlu0 %v176
    %v178 = vpop.xlane.xlu0 %177
    %v179 = vsel %vm175, %v173, -inf
    %180 = vmax.xlane.f32.xlu0 %v179
    %v181 = vpop.xlane.xlu0 %180
    %v182 = vsub.f32 %v170, %v178
    %v183 = vsub.f32 %v173, %v181
    %v184 = vmul.f32 %v182, 1.442695
    %v185 = vpow.pop %v184
    %v186 = vmul.f32 %v183, 1.442695
    %v187 = vpow.pop %v186
    %v188 = vsel %vm175, %v185, 0.0
    %189 = vadd.xlane.f32.xlu0 %v188
    %v190 = vpop.xlane.xlu0 %189
    %v191 = vsel %vm175, %v187, 0.0
    %192 = vadd.xlane.f32.xlu0 %v191
    %v193 = vpop.xlane.xlu0 %192
    %v194 = vrcp.pop %v190
    %v195 = vrcp.pop %v193
    %v196 = vmul.f32 %v190, %v194
    %v197 = vmul.f32 %v193, %v195
    %v198 = vsub.f32 2.0, %v196
    %v199 = vsub.f32 2.0, %v197
    %v200 = vmul.f32 %v194, %v198
    %v201 = vmul.f32 %v195, %v199
    %v202 = vmul.f32 %v185, %v200
    %v203 = vmul.f32 %v187, %v201
    %204 = vrot.lane.b32.xlu0 %v132, 64
    %v205 = vpop.permute.xlu0 %204
    %206 = vrot.lane.b32.xlu0 %v135, 64
    %v207 = vpop.permute.xlu0 %206
    %v211 = vsel %vm175, %v202, 0
    %v214 = vsel %vm175, %v203, 0
    %216 = vmatpush.msra.mxu0 0.0
    %217 = vmatpush.msra.mxu0 0.0
    %218 = vmatpush.msra.mxu0 0.0
    %219 = vmatpush.msra.mxu0 0.0
    %220 = vmatpush.msra.mxu0 0.0
    %221 = vmatpush.msra.mxu0 0.0
    %222 = vmatpush.msra.mxu0 0.0
    %223 = vmatpush.msra.mxu0 0.0
    %224 = vmatpush.msra.mxu0 0.0
    %225 = vmatpush.msra.mxu0 0.0
    %226 = vmatpush.msra.mxu0 0.0
    %227 = vmatpush.msra.mxu0 0.0
    %228 = vmatpush.msra.mxu0 0.0
    %229 = vmatpush.msra.mxu0 0.0
    %230 = vmatpush.msra.mxu0 %v207
    %231 = vmatpush.msra.mxu0 %v205
    %232 = vmatmul.f32.gmra.mxu0 %v211
    %v233 = vpop.f32.mrf.mxu0
    %v234 = vadd.f32 0.0, %v233
    %235 = vmatmul.f32.gmra.mxu0 %v214
    %v236 = vpop.f32.mrf.mxu0
    %v237 = vadd.f32 0.0, %v236
    %238 = vdwg.mxu0
    %239 = vrot.lane.b32.xlu0 %v132, 120
    %v240 = vpop.permute.xlu0 %239
    %241 = vrot.lane.b32.xlu0 %v135, 120
    %v242 = vpop.permute.xlu0 %241
    %243 = vrot.lane.b32.xlu0 %v132, 88
    %v244 = vpop.permute.xlu0 %243
    %245 = vrot.lane.b32.xlu0 %v135, 88
    %v246 = vpop.permute.xlu0 %245
    %v247 = vsel %vm143, %v240, 0
    %v249 = vsel %vm143, %v242, 0
    %v251 = vsel %vm143, %v244, 0
    %v253 = vsel %vm143, %v246, 0
    %255 = vmatpush.xpose.msra.mxu0 0.0
    %256 = vmatpush.xpose.msra.mxu0 0.0
    %257 = vmatpush.xpose.msra.mxu0 0.0
    %258 = vmatpush.xpose.msra.mxu0 0.0
    %259 = vmatpush.xpose.msra.mxu0 0.0
    %260 = vmatpush.xpose.msra.mxu0 0.0
    %261 = vmatpush.xpose.msra.mxu0 0.0
    %262 = vmatpush.xpose.msra.mxu0 0.0
    %263 = vmatpush.xpose.msra.mxu0 0.0
    %264 = vmatpush.xpose.msra.mxu0 0.0
    %265 = vmatpush.xpose.msra.mxu0 0.0
    %266 = vmatpush.xpose.msra.mxu0 0.0
    %267 = vmatpush.xpose.msra.mxu0 0.0
    %268 = vmatpush.xpose.msra.mxu0 0.0
    %269 = vmatpush.xpose.msra.mxu0 %v253
    %270 = vmatpush.xpose.msra.mxu0 %v251
    %271 = vmatmul.f32.gmra.mxu0 %v247
    %v272 = vpop.f32.mrf.mxu0
    %v273 = vadd.f32 %v100, %v272
    %274 = vmatmul.f32.gmra.mxu0 %v249
    %v275 = vpop.f32.mrf.mxu0
    %v276 = vadd.f32 %v101, %v275
    %277 = vdwg.mxu0
    %v278 = vsel %vm175, %v273, -inf
    %279 = vmax.xlane.f32.xlu0 %v278
    %v280 = vpop.xlane.xlu0 %279
    %v281 = vsel %vm175, %v276, -inf
    %282 = vmax.xlane.f32.xlu0 %v281
    %v283 = vpop.xlane.xlu0 %282
    %v284 = vsub.f32 %v273, %v280
    %v285 = vsub.f32 %v276, %v283
    %v286 = vmul.f32 %v284, 1.442695
    %v287 = vpow.pop %v286
    %v288 = vmul.f32 %v285, 1.442695
    %v289 = vpow.pop %v288
    %v290 = vsel %vm175, %v287, 0.0
    %291 = vadd.xlane.f32.xlu0 %v290
    %v292 = vpop.xlane.xlu0 %291
    %v293 = vsel %vm175, %v289, 0.0
    %294 = vadd.xlane.f32.xlu0 %v293
    %v295 = vpop.xlane.xlu0 %294
    %v296 = vrcp.pop %v292
    %v297 = vrcp.pop %v295
    %v298 = vmul.f32 %v292, %v296
    %v299 = vmul.f32 %v295, %v297
    %v300 = vsub.f32 2.0, %v298
    %v301 = vsub.f32 2.0, %v299
    %v302 = vmul.f32 %v296, %v300
    %v303 = vmul.f32 %v297, %v301
    %v304 = vmul.f32 %v287, %v302
    %v305 = vmul.f32 %v289, %v303
    %306 = vrot.lane.b32.xlu0 %v132, 56
    %v307 = vpop.permute.xlu0 %306
    %308 = vrot.lane.b32.xlu0 %v135, 56
    %v309 = vpop.permute.xlu0 %308
    %v313 = vsel %vm175, %v304, 0
    %v316 = vsel %vm175, %v305, 0
    %318 = vmatpush.msra.mxu0 0.0
    %319 = vmatpush.msra.mxu0 0.0
    %320 = vmatpush.msra.mxu0 0.0
    %321 = vmatpush.msra.mxu0 0.0
    %322 = vmatpush.msra.mxu0 0.0
    %323 = vmatpush.msra.mxu0 0.0
    %324 = vmatpush.msra.mxu0 0.0
    %325 = vmatpush.msra.mxu0 0.0
    %326 = vmatpush.msra.mxu0 0.0
    %327 = vmatpush.msra.mxu0 0.0
    %328 = vmatpush.msra.mxu0 0.0
    %329 = vmatpush.msra.mxu0 0.0
    %330 = vmatpush.msra.mxu0 0.0
    %331 = vmatpush.msra.mxu0 0.0
    %332 = vmatpush.msra.mxu0 %v309
    %333 = vmatpush.msra.mxu0 %v307
    %334 = vmatmul.f32.gmra.mxu0 %v313
    %v335 = vpop.f32.mrf.mxu0
    %v336 = vadd.f32 0.0, %v335
    %337 = vmatmul.f32.gmra.mxu0 %v316
    %v338 = vpop.f32.mrf.mxu0
    %v339 = vadd.f32 0.0, %v338
    %340 = vdwg.mxu0
    %341 = vrot.lane.b32.xlu0 %v132, 112
    %v342 = vpop.permute.xlu0 %341
    %343 = vrot.lane.b32.xlu0 %v135, 112
    %v344 = vpop.permute.xlu0 %343
    %345 = vrot.lane.b32.xlu0 %v132, 80
    %v346 = vpop.permute.xlu0 %345
    %347 = vrot.lane.b32.xlu0 %v135, 80
    %v348 = vpop.permute.xlu0 %347
    %v349 = vsel %vm143, %v342, 0
    %v351 = vsel %vm143, %v344, 0
    %v353 = vsel %vm143, %v346, 0
    %v355 = vsel %vm143, %v348, 0
    %357 = vmatpush.xpose.msra.mxu0 0.0
    %358 = vmatpush.xpose.msra.mxu0 0.0
    %359 = vmatpush.xpose.msra.mxu0 0.0
    %360 = vmatpush.xpose.msra.mxu0 0.0
    %361 = vmatpush.xpose.msra.mxu0 0.0
    %362 = vmatpush.xpose.msra.mxu0 0.0
    %363 = vmatpush.xpose.msra.mxu0 0.0
    %364 = vmatpush.xpose.msra.mxu0 0.0
    %365 = vmatpush.xpose.msra.mxu0 0.0
    %366 = vmatpush.xpose.msra.mxu0 0.0
    %367 = vmatpush.xpose.msra.mxu0 0.0
    %368 = vmatpush.xpose.msra.mxu0 0.0
    %369 = vmatpush.xpose.msra.mxu0 0.0
    %370 = vmatpush.xpose.msra.mxu0 0.0
    %371 = vmatpush.xpose.msra.mxu0 %v355
    %372 = vmatpush.xpose.msra.mxu0 %v353
    %373 = vmatmul.f32.gmra.mxu0 %v349
    %v374 = vpop.f32.mrf.mxu0
    %v375 = vadd.f32 %v100, %v374
    %376 = vmatmul.f32.gmra.mxu0 %v351
    %v377 = vpop.f32.mrf.mxu0
    %v378 = vadd.f32 %v101, %v377
    %379 = vdwg.mxu0
    %v380 = vsel %vm175, %v375, -inf
    %381 = vmax.xlane.f32.xlu0 %v380
    %v382 = vpop.xlane.xlu0 %381
    %v383 = vsel %vm175, %v378, -inf
    %384 = vmax.xlane.f32.xlu0 %v383
    %v385 = vpop.xlane.xlu0 %384
    %v386 = vsub.f32 %v375, %v382
    %v387 = vsub.f32 %v378, %v385
    %v388 = vmul.f32 %v386, 1.442695
    %v389 = vpow.pop %v388
    %v390 = vmul.f32 %v387, 1.442695
    %v391 = vpow.pop %v390
    %v392 = vsel %vm175, %v389, 0.0
    %393 = vadd.xlane.f32.xlu0 %v392
    %v394 = vpop.xlane.xlu0 %393
    %v395 = vsel %vm175, %v391, 0.0
    %396 = vadd.xlane.f32.xlu0 %v395
    %v397 = vpop.xlane.xlu0 %396
    %v398 = vrcp.pop %v394
    %v399 = vrcp.pop %v397
    %v400 = vmul.f32 %v394, %v398
    %v401 = vmul.f32 %v397, %v399
    %v402 = vsub.f32 2.0, %v400
    %v403 = vsub.f32 2.0, %v401
    %v404 = vmul.f32 %v398, %v402
    %v405 = vmul.f32 %v399, %v403
    %v406 = vmul.f32 %v389, %v404
    %v407 = vmul.f32 %v391, %v405
    %408 = vrot.lane.b32.xlu0 %v132, 48
    %v409 = vpop.permute.xlu0 %408
    %410 = vrot.lane.b32.xlu0 %v135, 48
    %v411 = vpop.permute.xlu0 %410
    %v415 = vsel %vm175, %v406, 0
    %v418 = vsel %vm175, %v407, 0
    %420 = vmatpush.msra.mxu0 0.0
    %421 = vmatpush.msra.mxu0 0.0
    %422 = vmatpush.msra.mxu0 0.0
    %423 = vmatpush.msra.mxu0 0.0
    %424 = vmatpush.msra.mxu0 0.0
    %425 = vmatpush.msra.mxu0 0.0
    %426 = vmatpush.msra.mxu0 0.0
    %427 = vmatpush.msra.mxu0 0.0
    %428 = vmatpush.msra.mxu0 0.0
    %429 = vmatpush.msra.mxu0 0.0
    %430 = vmatpush.msra.mxu0 0.0
    %431 = vmatpush.msra.mxu0 0.0
    %432 = vmatpush.msra.mxu0 0.0
    %433 = vmatpush.msra.mxu0 0.0
    %434 = vmatpush.msra.mxu0 %v411
    %435 = vmatpush.msra.mxu0 %v409
    %436 = vmatmul.f32.gmra.mxu0 %v415
    %v437 = vpop.f32.mrf.mxu0
    %v438 = vadd.f32 0.0, %v437
    %439 = vmatmul.f32.gmra.mxu0 %v418
    %v440 = vpop.f32.mrf.mxu0
    %v441 = vadd.f32 0.0, %v440
    %442 = vdwg.mxu0
    %443 = vrot.lane.b32.xlu0 %v132, 104
    %v444 = vpop.permute.xlu0 %443
    %445 = vrot.lane.b32.xlu0 %v135, 104
    %v446 = vpop.permute.xlu0 %445
    %447 = vrot.lane.b32.xlu0 %v132, 72
    %v448 = vpop.permute.xlu0 %447
    %449 = vrot.lane.b32.xlu0 %v135, 72
    %v450 = vpop.permute.xlu0 %449
    %v451 = vsel %vm143, %v444, 0
    %v453 = vsel %vm143, %v446, 0
    %v455 = vsel %vm143, %v448, 0
    %v457 = vsel %vm143, %v450, 0
    %459 = vmatpush.xpose.msra.mxu0 0.0
    %460 = vmatpush.xpose.msra.mxu0 0.0
    %461 = vmatpush.xpose.msra.mxu0 0.0
    %462 = vmatpush.xpose.msra.mxu0 0.0
    %463 = vmatpush.xpose.msra.mxu0 0.0
    %464 = vmatpush.xpose.msra.mxu0 0.0
    %465 = vmatpush.xpose.msra.mxu0 0.0
    %466 = vmatpush.xpose.msra.mxu0 0.0
    %467 = vmatpush.xpose.msra.mxu0 0.0
    %468 = vmatpush.xpose.msra.mxu0 0.0
    %469 = vmatpush.xpose.msra.mxu0 0.0
    %470 = vmatpush.xpose.msra.mxu0 0.0
    %471 = vmatpush.xpose.msra.mxu0 0.0
    %472 = vmatpush.xpose.msra.mxu0 0.0
    %473 = vmatpush.xpose.msra.mxu0 %v457
    %474 = vmatpush.xpose.msra.mxu0 %v455
    %475 = vmatmul.f32.gmra.mxu0 %v451
    %v476 = vpop.f32.mrf.mxu0
    %v477 = vadd.f32 %v100, %v476
    %478 = vmatmul.f32.gmra.mxu0 %v453
    %v479 = vpop.f32.mrf.mxu0
    %v480 = vadd.f32 %v101, %v479
    %481 = vdwg.mxu0
    %v482 = vsel %vm175, %v477, -inf
    %483 = vmax.xlane.f32.xlu0 %v482
    %v484 = vpop.xlane.xlu0 %483
    %v485 = vsel %vm175, %v480, -inf
    %486 = vmax.xlane.f32.xlu0 %v485
    %v487 = vpop.xlane.xlu0 %486
    %v488 = vsub.f32 %v477, %v484
    %v489 = vsub.f32 %v480, %v487
    %v490 = vmul.f32 %v488, 1.442695
    %v491 = vpow.pop %v490
    %v492 = vmul.f32 %v489, 1.442695
    %v493 = vpow.pop %v492
    %v494 = vsel %vm175, %v491, 0.0
    %495 = vadd.xlane.f32.xlu0 %v494
    %v496 = vpop.xlane.xlu0 %495
    %v497 = vsel %vm175, %v493, 0.0
    %498 = vadd.xlane.f32.xlu0 %v497
    %v499 = vpop.xlane.xlu0 %498
    %v500 = vrcp.pop %v496
    %v501 = vrcp.pop %v499
    %v502 = vmul.f32 %v496, %v500
    %v503 = vmul.f32 %v499, %v501
    %v504 = vsub.f32 2.0, %v502
    %v505 = vsub.f32 2.0, %v503
    %v506 = vmul.f32 %v500, %v504
    %v507 = vmul.f32 %v501, %v505
    %v508 = vmul.f32 %v491, %v506
    %v509 = vmul.f32 %v493, %v507
    %510 = vrot.lane.b32.xlu0 %v132, 40
    %v511 = vpop.permute.xlu0 %510
    %512 = vrot.lane.b32.xlu0 %v135, 40
    %v513 = vpop.permute.xlu0 %512
    %v517 = vsel %vm175, %v508, 0
    %v520 = vsel %vm175, %v509, 0
    %522 = vmatpush.msra.mxu0 0.0
    %523 = vmatpush.msra.mxu0 0.0
    %524 = vmatpush.msra.mxu0 0.0
    %525 = vmatpush.msra.mxu0 0.0
    %526 = vmatpush.msra.mxu0 0.0
    %527 = vmatpush.msra.mxu0 0.0
    %528 = vmatpush.msra.mxu0 0.0
    %529 = vmatpush.msra.mxu0 0.0
    %530 = vmatpush.msra.mxu0 0.0
    %531 = vmatpush.msra.mxu0 0.0
    %532 = vmatpush.msra.mxu0 0.0
    %533 = vmatpush.msra.mxu0 0.0
    %534 = vmatpush.msra.mxu0 0.0
    %535 = vmatpush.msra.mxu0 0.0
    %536 = vmatpush.msra.mxu0 %v513
    %537 = vmatpush.msra.mxu0 %v511
    %538 = vmatmul.f32.gmra.mxu0 %v517
    %v539 = vpop.f32.mrf.mxu0
    %v540 = vadd.f32 0.0, %v539
    %541 = vmatmul.f32.gmra.mxu0 %v520
    %v542 = vpop.f32.mrf.mxu0
    %v543 = vadd.f32 0.0, %v542
    %544 = vdwg.mxu0
    %547 = vrot.lane.b32.xlu0 %v336, 8
    %v548 = vpop.permute.xlu0 %547
    %549 = vrot.lane.b32.xlu0 %v339, 8
    %v550 = vpop.permute.xlu0 %549
    %555 = vrot.lane.b32.xlu0 %v438, 16
    %v556 = vpop.permute.xlu0 %555
    %557 = vrot.lane.b32.xlu0 %v441, 16
    %v558 = vpop.permute.xlu0 %557
    %563 = vrot.lane.b32.xlu0 %v540, 24
    %v564 = vpop.permute.xlu0 %563
    %565 = vrot.lane.b32.xlu0 %v543, 24
    %v566 = vpop.permute.xlu0 %565
    %v569 = vsel %vm143, %v234, %v548
    %v570 = vsel %vm143, %v237, %v550
    %v571 = vsel %vm175, %v569, %v556
    %v572 = vsel %vm175, %v570, %v558
    %vm573 = vcmask 195584
    %v574 = vsel %vm573, %v571, %v564
    %v575 = vsel %vm573, %v572, %v566
    %v576 = vld [vmem:[%s2] sm:$0xff]
    %v577 = vld [vmem:[%s2 + $0x8] sm:$0xff]
    %v578 = vld [vmem:[%s2 + $0x10] sm:$0xff]
    %v579 = vld [vmem:[%s2 + $0x18] sm:$0xff]
    %v580 = vperm.slane %v56, 1
    %v582 = vsel %vm107, %v574, 0
    %v585 = vsel %vm107, %v575, 0
    %587 = vmatpush.msra.mxu0 0.0
    %588 = vmatpush.msra.mxu0 0.0
    %589 = vmatpush.msra.mxu0 0.0
    %590 = vmatpush.msra.mxu0 0.0
    %591 = vmatpush.msra.mxu0 0.0
    %592 = vmatpush.msra.mxu0 0.0
    %593 = vmatpush.msra.mxu0 0.0
    %594 = vmatpush.msra.mxu0 0.0
    %595 = vmatpush.msra.mxu0 0.0
    %596 = vmatpush.msra.mxu0 0.0
    %597 = vmatpush.msra.mxu0 0.0
    %598 = vmatpush.msra.mxu0 0.0
    %599 = vmatpush.msra.mxu0 %v579
    %600 = vmatpush.msra.mxu0 %v578
    %601 = vmatpush.msra.mxu0 %v577
    %602 = vmatpush.msra.mxu0 %v576
    %603 = vmatmul.f32.gmra.mxu0 %v582
    %v604 = vpop.f32.mrf.mxu0
    %v605 = vadd.f32 %v580, %v604
    %606 = vmatmul.f32.gmra.mxu0 %v585
    %v607 = vpop.f32.mrf.mxu0
    %v608 = vadd.f32 %v580, %v607
    %609 = vdwg.mxu0
    %v610 = vadd.f32 %v54, %v605
    %v611 = vadd.f32 %v55, %v608
    %v612 = vsel %vm107, %v610, 0.0
    %613 = vadd.xlane.f32.xlu0 %v612
    %v614 = vpop.xlane.xlu0 %613
    %v615 = vsel %vm107, %v611, 0.0
    %616 = vadd.xlane.f32.xlu0 %v615
    %v617 = vpop.xlane.xlu0 %616
    %v618 = vrcp.pop 32.0
    %v619 = vmul.f32 32.0, %v618
    %v620 = vsub.f32 1.0, %v619
    %v621 = vmul.f32 %v618, %v620
    %v622 = vadd.f32 %v618, %v621
    %vm623 = vweird.f32 %v618
    %v624 = vsel %vm623, %v618, %v622
    %v625 = vmul.f32 %v614, %v624
    %v626 = vmul.f32 %v617, %v624
    %v627 = vsub.f32 %v610, %v625
    %v628 = vsub.f32 %v611, %v626
    %v629 = vmul.f32 %v627, %v627
    %v630 = vmul.f32 %v628, %v628
    %v631 = vsel %vm107, %v629, 0.0
    %632 = vadd.xlane.f32.xlu0 %v631
    %v633 = vpop.xlane.xlu0 %632
    %v634 = vsel %vm107, %v630, 0.0
    %635 = vadd.xlane.f32.xlu0 %v634
    %v636 = vpop.xlane.xlu0 %635
    %v637 = vmul.f32 %v633, %v624
    %v638 = vmul.f32 %v636, %v624
    %v639 = vadd.f32 %v637, 1e-05
    %v640 = vadd.f32 %v638, 1e-05
    %v641 = vrsqrt.pop %v639
    %v642 = vmul.f32 %v641, %v639
    %v643 = vmul.f32 %v642, %v641
    %v644 = vmul.f32 0.5, %v643
    %v645 = vsub.f32 1.5, %v644
    %v646 = vmul.f32 %v641, %v645
    %vm647 = vweird.f32 %v639
    %vm648 = vweird.f32 %v641
    %vm649 = vmor %vm647, %vm648
    %v650 = vsel %vm649, %v641, %v646
    %v651 = vrsqrt.pop %v640
    %v652 = vmul.f32 %v651, %v640
    %v653 = vmul.f32 %v652, %v651
    %v654 = vmul.f32 0.5, %v653
    %v655 = vsub.f32 1.5, %v654
    %v656 = vmul.f32 %v651, %v655
    %vm657 = vweird.f32 %v640
    %vm658 = vweird.f32 %v651
    %vm659 = vmor %vm657, %vm658
    %v660 = vsel %vm659, %v651, %v656
    %v661 = vmul.f32 %v627, %v650
    %v662 = vmul.f32 %v628, %v660
    %v663 = vperm.slane %v56, 2
    %v664 = vmul.f32 %v661, %v663
    %v665 = vmul.f32 %v662, %v663
    %v666 = vperm.slane %v56, 3
    %v667 = vadd.f32 %v664, %v666
    %v668 = vadd.f32 %v665, %v666
    %v669 = vld [vmem:[%s3] sm:$0xff]
    %v670 = vld [vmem:[%s3 + $0x8] sm:$0xff]
    %v671 = vld [vmem:[%s3 + $0x10] sm:$0xff]
    %v672 = vld [vmem:[%s3 + $0x18] sm:$0xff]
    %v673 = vperm.slane %v56, 4
    %v675 = vsel %vm107, %v667, 0
    %v678 = vsel %vm107, %v668, 0
    %680 = vmatpush.msra.mxu0 0.0
    %681 = vmatpush.msra.mxu0 0.0
    %682 = vmatpush.msra.mxu0 0.0
    %683 = vmatpush.msra.mxu0 0.0
    %684 = vmatpush.msra.mxu0 0.0
    %685 = vmatpush.msra.mxu0 0.0
    %686 = vmatpush.msra.mxu0 0.0
    %687 = vmatpush.msra.mxu0 0.0
    %688 = vmatpush.msra.mxu0 0.0
    %689 = vmatpush.msra.mxu0 0.0
    %690 = vmatpush.msra.mxu0 0.0
    %691 = vmatpush.msra.mxu0 0.0
    %692 = vmatpush.msra.mxu0 %v672
    %693 = vmatpush.msra.mxu0 %v671
    %694 = vmatpush.msra.mxu0 %v670
    %695 = vmatpush.msra.mxu0 %v669
    %696 = vmatmul.f32.gmra.mxu0 %v675
    %v697 = vpop.f32.mrf.mxu0
    %v698 = vadd.f32 %v673, %v697
    %699 = vmatmul.f32.gmra.mxu0 %v678
    %v700 = vpop.f32.mrf.mxu0
    %v701 = vadd.f32 %v673, %v700
    %702 = vdwg.mxu0
    %v703 = vmax.f32 %v698, 0.0
    %v704 = vmax.f32 %v701, 0.0
    %v705 = vld [vmem:[%s4] sm:$0xff]
    %v706 = vld [vmem:[%s4 + $0x8] sm:$0xff]
    %v707 = vld [vmem:[%s4 + $0x10] sm:$0xff]
    %v708 = vld [vmem:[%s4 + $0x18] sm:$0xff]
    %v709 = vld [vmem:[%s4 + $0x20] sm:$0xff]
    %v710 = vld [vmem:[%s4 + $0x28] sm:$0xff]
    %v711 = vld [vmem:[%s4 + $0x30] sm:$0xff]
    %v712 = vld [vmem:[%s4 + $0x38] sm:$0xff]
    %v713 = vperm.slane %v56, 5
    %vm714 = vcmask 523264
    %v716 = vsel %vm714, %v703, 0
    %v719 = vsel %vm714, %v704, 0
    %721 = vmatpush.msra.mxu0 0.0
    %722 = vmatpush.msra.mxu0 0.0
    %723 = vmatpush.msra.mxu0 0.0
    %724 = vmatpush.msra.mxu0 0.0
    %725 = vmatpush.msra.mxu0 0.0
    %726 = vmatpush.msra.mxu0 0.0
    %727 = vmatpush.msra.mxu0 0.0
    %728 = vmatpush.msra.mxu0 0.0
    %729 = vmatpush.msra.mxu0 %v712
    %730 = vmatpush.msra.mxu0 %v711
    %731 = vmatpush.msra.mxu0 %v710
    %732 = vmatpush.msra.mxu0 %v709
    %733 = vmatpush.msra.mxu0 %v708
    %734 = vmatpush.msra.mxu0 %v707
    %735 = vmatpush.msra.mxu0 %v706
    %736 = vmatpush.msra.mxu0 %v705
    %737 = vmatmul.f32.gmra.mxu0 %v716
    %v738 = vpop.f32.mrf.mxu0
    %v739 = vadd.f32 %v713, %v738
    %740 = vmatmul.f32.gmra.mxu0 %v719
    %v741 = vpop.f32.mrf.mxu0
    %v742 = vadd.f32 %v713, %v741
    %743 = vdwg.mxu0
    %v744 = vadd.f32 %v667, %v739
    %v745 = vadd.f32 %v668, %v742
    %v746 = vsel %vm107, %v744, 0.0
    %747 = vadd.xlane.f32.xlu0 %v746
    %v748 = vpop.xlane.xlu0 %747
    %v749 = vsel %vm107, %v745, 0.0
    %750 = vadd.xlane.f32.xlu0 %v749
    %v751 = vpop.xlane.xlu0 %750
    %v752 = vmul.f32 %v748, %v624
    %v753 = vmul.f32 %v751, %v624
    %v754 = vsub.f32 %v744, %v752
    %v755 = vsub.f32 %v745, %v753
    %v756 = vmul.f32 %v754, %v754
    %v757 = vmul.f32 %v755, %v755
    %v758 = vsel %vm107, %v756, 0.0
    %759 = vadd.xlane.f32.xlu0 %v758
    %v760 = vpop.xlane.xlu0 %759
    %v761 = vsel %vm107, %v757, 0.0
    %762 = vadd.xlane.f32.xlu0 %v761
    %v763 = vpop.xlane.xlu0 %762
    %v764 = vmul.f32 %v760, %v624
    %v765 = vmul.f32 %v763, %v624
    %v766 = vadd.f32 %v764, 1e-05
    %v767 = vadd.f32 %v765, 1e-05
    %v768 = vrsqrt.pop %v766
    %v769 = vmul.f32 %v768, %v766
    %v770 = vmul.f32 %v769, %v768
    %v771 = vmul.f32 0.5, %v770
    %v772 = vsub.f32 1.5, %v771
    %v773 = vmul.f32 %v768, %v772
    %vm774 = vweird.f32 %v766
    %vm775 = vweird.f32 %v768
    %vm776 = vmor %vm774, %vm775
    %v777 = vsel %vm776, %v768, %v773
    %v778 = vrsqrt.pop %v767
    %v779 = vmul.f32 %v778, %v767
    %v780 = vmul.f32 %v779, %v778
    %v781 = vmul.f32 0.5, %v780
    %v782 = vsub.f32 1.5, %v781
    %v783 = vmul.f32 %v778, %v782
    %vm784 = vweird.f32 %v767
    %vm785 = vweird.f32 %v778
    %vm786 = vmor %vm784, %vm785
    %v787 = vsel %vm786, %v778, %v783
    %v788 = vmul.f32 %v754, %v777
    %v789 = vmul.f32 %v755, %v787
    %v790 = vperm.slane %v56, 6
    %v791 = vmul.f32 %v788, %v790
    %v792 = vmul.f32 %v789, %v790
    %v793 = vperm.slane %v56, 7
    %v794 = vadd.f32 %v791, %v793
    %v795 = vadd.f32 %v792, %v793
    %796 = vst.msk [vmem:[#allocation7] sm:$0xff] %vm107, %v794
    %797 = vst.msk [vmem:[#allocation7 + $0x8] sm:$0xff] %vm107, %v795
    // Predicated region
    $region34: #{transformer_encoder.1} parent=1 // pred_check
      _
    $region35: #{transformer_encoder.1} parent=1 // pred_check_branch
      %799 = sbr.rel (0) target = $region37
    $region36: #{transformer_encoder.1} parent=1 // pred_region
      %801 = vsyncadd [#allocation4], 0
      %s802 = sshll.u32 [#allocation7], 4
      %s803 = int_to_ptr.vmem [resolvable:$true] %s802
      %s804 = sshll.u32 %s6, 4
      %s805 = int_to_ptr.hbm [resolvable:$true] %s804
      %810 = dma.vmem_to_hbm [thread:$0]  %s803, 256, %s805, [#allocation4], 128, 128, 8
    $region37: #{transformer_encoder.1} parent=1 // pred_fallthru
      _
    // Predicated region
    $region38: #{transformer_encoder.1} parent=1 // pred_check
      _
    $region39: #{transformer_encoder.1} parent=1 // pred_check_branch
      %812 = sbr.rel (0) target = $region41
    $region40: #{transformer_encoder.1} parent=1 // pred_region
      %814 = dma.done [#allocation4], 256
    $region41: #{transformer_encoder.1} parent=1 // pred_fallthru
      _
    %815 = vsyncpa [#allocation3], 1
    %816 = vsyncpa [#allocation6], 1
    %817 = vsyncpa [#allocation4], 1

</llo_original>
